<compile_context>
chip_gen: v6e
topology: v6e:2x2x1
jax: 0.10.0
libtpu: 0.0.40
codegen_flags: <defaults>
</compile_context>

<pallas_src>
import jax
import jax.numpy as jnp
from jax import lax
from jax.experimental import pallas as pl
from jax.experimental.pallas import tpu as pltpu


def _round_up(x, m):
    return (x + m - 1) // m * m


def _encoder_rnn_kernel(x_ref, wih_ref, whh_ref, b_ref, out_ref, h_scr):
    """Processes one (batch tile, time chunk) block of the vanilla RNN.

    x_ref   : (Bt, Tc, Ip)  input chunk
    wih_ref : (Ip, Hp)      W_ih^T (zero padded)
    whh_ref : (Hp, Hp)      W_hh^T (zero padded)
    b_ref   : (1, Hp)       b_ih + b_hh (zero padded)
    out_ref : (Bt, Tc, Hp)  hidden states for this chunk
    h_scr   : (Bt, Hp) f32  recurrent state carried across time chunks
    """
    c = pl.program_id(1)  # time-chunk index (sequential / "arbitrary")

    @pl.when(c == 0)
    def _():
        h_scr[...] = jnp.zeros_like(h_scr)

    bt, tc, ip = x_ref.shape
    hp = whh_ref.shape[0]

    # Prologue: one well-shaped GEMM for the whole chunk's input projection,
    # bias folded in and broadcast once, outside the serial loop.
    x2 = x_ref[...].reshape(bt * tc, ip)                       # (Bt*Tc, Ip)
    xw = jnp.dot(x2, wih_ref[...],
                 preferred_element_type=jnp.float32)           # (Bt*Tc, Hp)
    xw = xw.reshape(bt, tc, hp) + b_ref[...]                   # (Bt, Tc, Hp)

    whh = whh_ref[...]
    h = h_scr[...]
    # Serial recurrence: only the H x H matmul + tanh per step.  Static
    # unroll -> all slices / stores use static indices (no dynamic indexing).
    for t in range(tc):
        h = jnp.tanh(xw[:, t, :]
                     + jnp.dot(h, whh, preferred_element_type=jnp.float32))
        out_ref[:, t, :] = h.astype(out_ref.dtype)

    h_scr[...] = h


def encoder_rnn_forward(x, w_ih, w_hh, b_ih, b_hh, *, b_tile=8, t_chunk=8):
    """Pallas EncoderRNN forward.

    x    : (B, T, I)  float32, batch_first like nn.RNN(batch_first=True)
    w_ih : (H, I), w_hh : (H, H), b_ih : (H,), b_hh : (H,)  (PyTorch layout)

    Returns (outputs, hidden) with outputs: (B, T, H), hidden: (1, B, H).
    """
    B, T, I = x.shape
    H = w_ih.shape[0]

    Bp = _round_up(B, b_tile)          # sublane-aligned batch
    Tp = _round_up(T, t_chunk)         # whole number of time chunks
    Ip = _round_up(I, 128)             # lane-aligned input features
    Hp = _round_up(H, 128)             # lane-aligned hidden features

    # Zero-pad once in the wrapper (exact: zeros contribute nothing).
    x_p = jnp.zeros((Bp, Tp, Ip), x.dtype).at[:B, :T, :I].set(x)
    wih_t = jnp.zeros((Ip, Hp), jnp.float32).at[:I, :H].set(w_ih.T)
    whh_t = jnp.zeros((Hp, Hp), jnp.float32).at[:H, :H].set(w_hh.T)
    bias = jnp.zeros((1, Hp), jnp.float32).at[0, :H].set(b_ih + b_hh)

    out_p = pl.pallas_call(
        _encoder_rnn_kernel,
        out_shape=jax.ShapeDtypeStruct((Bp, Tp, Hp), x.dtype),
        grid_spec=pltpu.PrefetchScalarGridSpec(
            num_scalar_prefetch=0,
            grid=(Bp // b_tile, Tp // t_chunk),
            in_specs=[
                pl.BlockSpec((b_tile, t_chunk, Ip), lambda b, c: (b, c, 0)),
                pl.BlockSpec((Ip, Hp), lambda b, c: (0, 0)),
                pl.BlockSpec((Hp, Hp), lambda b, c: (0, 0)),
                pl.BlockSpec((1, Hp), lambda b, c: (0, 0)),
            ],
            out_specs=pl.BlockSpec((b_tile, t_chunk, Hp),
                                   lambda b, c: (b, c, 0)),
            scratch_shapes=[pltpu.VMEM((b_tile, Hp), jnp.float32)],
        ),
        compiler_params=pltpu.CompilerParams(
            # batch tiles independent (shardable on v7x megacore);
            # time chunks carry the recurrent state -> sequential.
            dimension_semantics=("parallel", "arbitrary"),
        ),
    )(x_p, wih_t, whh_t, bias)

    outputs = out_p[:B, :T, :H]             # (B, T, H)
    hidden = outputs[:, T - 1, :][None]     # (1, B, H) == nn.RNN h_n
    return outputs, hidden


def _reference_rnn(x, w_ih, w_hh, b_ih, b_hh):
    """Pure-JAX reference (mirrors torch.nn.RNN with tanh, batch_first)."""
    B, T, I = x.shape
    H = w_ih.shape[0]
    h0 = jnp.zeros((B, H), jnp.float32)

    def step(h, x_t):
        h_new = jnp.tanh(x_t @ w_ih.T + b_ih + h @ w_hh.T + b_hh)
        return h_new, h_new

    h_last, ys = lax.scan(step, h0, jnp.transpose(x, (1, 0, 2)))
    return jnp.transpose(ys, (1, 0, 2)), h_last[None]


if __name__ == "__main__":
    hidden_size = 10
    input_size = 5
    batch = 2
    seq = 8

    key = jax.random.PRNGKey(0)
    k_x, k_wih, k_whh, k_bih, k_bhh = jax.random.split(key, 5)

    # PyTorch nn.RNN init: U(-1/sqrt(H), 1/sqrt(H)) for all params.
    bound = 1.0 / jnp.sqrt(jnp.float32(hidden_size))
    w_ih = jax.random.uniform(k_wih, (hidden_size, input_size), jnp.float32,
                              -bound, bound)
    w_hh = jax.random.uniform(k_whh, (hidden_size, hidden_size), jnp.float32,
                              -bound, bound)
    b_ih = jax.random.uniform(k_bih, (hidden_size,), jnp.float32, -bound, bound)
    b_hh = jax.random.uniform(k_bhh, (hidden_size,), jnp.float32, -bound, bound)

    x = jax.random.normal(k_x, (batch, seq, input_size), jnp.float32)

    outputs, hidden = jax.jit(encoder_rnn_forward)(x, w_ih, w_hh, b_ih, b_hh)
    jax.block_until_ready((outputs, hidden))

    ref_out, ref_hid = _reference_rnn(x, w_ih, w_hh, b_ih, b_hh)
    assert outputs.shape == (batch, seq, hidden_size)
    assert hidden.shape == (1, batch, hidden_size)
    assert jnp.allclose(outputs, ref_out, atol=1e-5, rtol=1e-5)
    assert jnp.allclose(hidden, ref_hid, atol=1e-5, rtol=1e-5)

    print("KERNEL_OK")
</pallas_src>

<mosaic_0001>
module attributes {stable_mosaic.version = 11 : i64} {
  func.func @_encoder_rnn_kernel(%arg0: i32, %arg1: i32, %arg2: memref<8x8x128xf32, #tpu.memory_space<vmem>>, %arg3: memref<128x128xf32, #tpu.memory_space<vmem>>, %arg4: memref<128x128xf32, #tpu.memory_space<vmem>>, %arg5: memref<1x128xf32, #tpu.memory_space<vmem>>, %arg6: memref<8x8x128xf32, #tpu.memory_space<vmem>>, %arg7: memref<8x128xf32, #tpu.memory_space<vmem>>) attributes {dimension_semantics = [#tpu.dimension_semantics<parallel>, #tpu.dimension_semantics<arbitrary>], iteration_bounds = array<i64: 1, 1>, scalar_prefetch = 0 : i64, scratch_operands = 1 : i64, tpu.core_type = #tpu.core_type<tc>, window_params = [{transform_indices = @transform_0, window_bounds = array<i64: 8, 8, 128>}, {pipeline_mode = #tpu.pipeline_mode<synchronous>, transform_indices = @transform_1, window_bounds = array<i64: 128, 128>}, {pipeline_mode = #tpu.pipeline_mode<synchronous>, transform_indices = @transform_2, window_bounds = array<i64: 128, 128>}, {pipeline_mode = #tpu.pipeline_mode<synchronous>, transform_indices = @transform_3, window_bounds = array<i64: 1, 128>}, {transform_indices = @transform_4, window_bounds = array<i64: 8, 8, 128>}]} {
    %c0_i32 = arith.constant 0 : i32
    %0 = arith.cmpi eq, %arg1, %c0_i32 : i32
    %1 = arith.extui %0 : i1 to i32
    %c0_i32_0 = arith.constant 0 : i32
    %2 = arith.cmpi ne, %1, %c0_i32_0 : i32
    scf.if %2 {
      %cst_38 = arith.constant 0.000000e+00 : f32
      %79 = vector.broadcast %cst_38 : f32 to vector<8x128xf32>
      %c0_39 = arith.constant 0 : index
      %c0_40 = arith.constant 0 : index
      %80 = vector.load %arg7[%c0_39, %c0_40] : memref<8x128xf32, #tpu.memory_space<vmem>>, vector<8x128xf32>
      tpu.vector_store %arg7[%c0_39, %c0_40], %79 {strides = array<i32>} : memref<8x128xf32, #tpu.memory_space<vmem>>, vector<8x128xf32>,
    } else {
    }
    %c0 = arith.constant 0 : index
    %c0_1 = arith.constant 0 : index
    %c0_2 = arith.constant 0 : index
    %3 = vector.load %arg2[%c0, %c0_1, %c0_2] : memref<8x8x128xf32, #tpu.memory_space<vmem>>, vector<8x8x128xf32>
    %4 = vector.shape_cast %3 : vector<8x8x128xf32> to vector<64x128xf32>
    %c0_3 = arith.constant 0 : index
    %c0_4 = arith.constant 0 : index
    %5 = vector.load %arg3[%c0_3, %c0_4] : memref<128x128xf32, #tpu.memory_space<vmem>>, vector<128x128xf32>
    %cst = arith.constant dense<0.000000e+00> : vector<64x128xf32>
    %6 = tpu.matmul %4, %5, %cst {dimension_numbers = #tpu.dot_dimension_numbers<[1], [0], [0], [1], [0, 0, 1, 1], [], []>} : vector<64x128xf32>, vector<128x128xf32>, vector<64x128xf32> -> vector<64x128xf32>
    %7 = vector.shape_cast %6 : vector<64x128xf32> to vector<8x8x128xf32>
    %c0_5 = arith.constant 0 : index
    %c0_6 = arith.constant 0 : index
    %8 = vector.load %arg5[%c0_5, %c0_6] : memref<1x128xf32, #tpu.memory_space<vmem>>, vector<1x128xf32>
    %9 = vector.shape_cast %8 : vector<1x128xf32> to vector<1x1x128xf32>
    %10 = vector.broadcast %9 : vector<1x1x128xf32> to vector<8x8x128xf32>
    %11 = arith.addf %7, %10 : vector<8x8x128xf32>
    %c0_7 = arith.constant 0 : index
    %c0_8 = arith.constant 0 : index
    %12 = vector.load %arg4[%c0_7, %c0_8] : memref<128x128xf32, #tpu.memory_space<vmem>>, vector<128x128xf32>
    %c0_9 = arith.constant 0 : index
    %c0_10 = arith.constant 0 : index
    %13 = vector.load %arg7[%c0_9, %c0_10] : memref<8x128xf32, #tpu.memory_space<vmem>>, vector<8x128xf32>
    %14 = vector.extract_strided_slice %11 {offsets = [0, 0, 0], sizes = [8, 1, 128], strides = [1, 1, 1]} : vector<8x8x128xf32> to vector<8x1x128xf32>
    %15 = vector.shape_cast %14 : vector<8x1x128xf32> to vector<8x128xf32>
    %cst_11 = arith.constant dense<0.000000e+00> : vector<8x128xf32>
    %16 = tpu.matmul %13, %12, %cst_11 {dimension_numbers = #tpu.dot_dimension_numbers<[1], [0], [0], [1], [0, 0, 1, 1], [], []>} : vector<8x128xf32>, vector<128x128xf32>, vector<8x128xf32> -> vector<8x128xf32>
    %17 = arith.addf %15, %16 : vector<8x128xf32>
    %18 = math.tanh %17 : vector<8x128xf32>
    %c0_12 = arith.constant 0 : index
    %c0_13 = arith.constant 0 : index
    %c0_14 = arith.constant 0 : index
    %19 = vector.load %arg6[%c0_12, %c0_13, %c0_14] : memref<8x8x128xf32, #tpu.memory_space<vmem>>, vector<8x1x128xf32>
    %20 = vector.shape_cast %19 : vector<8x1x128xf32> to vector<8x128xf32>
    %21 = vector.shape_cast %18 : vector<8x128xf32> to vector<8x1x128xf32>
    tpu.vector_store %arg6[%c0_12, %c0_13, %c0_14], %21 {strides = array<i32>} : memref<8x8x128xf32, #tpu.memory_space<vmem>>, vector<8x1x128xf32>,
    %22 = vector.extract_strided_slice %11 {offsets = [0, 1, 0], sizes = [8, 1, 128], strides = [1, 1, 1]} : vector<8x8x128xf32> to vector<8x1x128xf32>
    %23 = vector.shape_cast %22 : vector<8x1x128xf32> to vector<8x128xf32>
    %cst_15 = arith.constant dense<0.000000e+00> : vector<8x128xf32>
    %24 = tpu.matmul %18, %12, %cst_15 {dimension_numbers = #tpu.dot_dimension_numbers<[1], [0], [0], [1], [0, 0, 1, 1], [], []>} : vector<8x128xf32>, vector<128x128xf32>, vector<8x128xf32> -> vector<8x128xf32>
    %25 = arith.addf %23, %24 : vector<8x128xf32>
    %26 = math.tanh %25 : vector<8x128xf32>
    %c0_16 = arith.constant 0 : index
    %c1 = arith.constant 1 : index
    %c0_17 = arith.constant 0 : index
    %27 = vector.load %arg6[%c0_16, %c1, %c0_17] : memref<8x8x128xf32, #tpu.memory_space<vmem>>, vector<8x1x128xf32>
    %28 = vector.shape_cast %27 : vector<8x1x128xf32> to vector<8x128xf32>
    %29 = vector.shape_cast %26 : vector<8x128xf32> to vector<8x1x128xf32>
    tpu.vector_store %arg6[%c0_16, %c1, %c0_17], %29 {strides = array<i32>} : memref<8x8x128xf32, #tpu.memory_space<vmem>>, vector<8x1x128xf32>,
    %30 = vector.extract_strided_slice %11 {offsets = [0, 2, 0], sizes = [8, 1, 128], strides = [1, 1, 1]} : vector<8x8x128xf32> to vector<8x1x128xf32>
    %31 = vector.shape_cast %30 : vector<8x1x128xf32> to vector<8x128xf32>
    %cst_18 = arith.constant dense<0.000000e+00> : vector<8x128xf32>
    %32 = tpu.matmul %26, %12, %cst_18 {dimension_numbers = #tpu.dot_dimension_numbers<[1], [0], [0], [1], [0, 0, 1, 1], [], []>} : vector<8x128xf32>, vector<128x128xf32>, vector<8x128xf32> -> vector<8x128xf32>
    %33 = arith.addf %31, %32 : vector<8x128xf32>
    %34 = math.tanh %33 : vector<8x128xf32>
    %c0_19 = arith.constant 0 : index
    %c2 = arith.constant 2 : index
    %c0_20 = arith.constant 0 : index
    %35 = vector.load %arg6[%c0_19, %c2, %c0_20] : memref<8x8x128xf32, #tpu.memory_space<vmem>>, vector<8x1x128xf32>
    %36 = vector.shape_cast %35 : vector<8x1x128xf32> to vector<8x128xf32>
    %37 = vector.shape_cast %34 : vector<8x128xf32> to vector<8x1x128xf32>
    tpu.vector_store %arg6[%c0_19, %c2, %c0_20], %37 {strides = array<i32>} : memref<8x8x128xf32, #tpu.memory_space<vmem>>, vector<8x1x128xf32>,
    %38 = vector.extract_strided_slice %11 {offsets = [0, 3, 0], sizes = [8, 1, 128], strides = [1, 1, 1]} : vector<8x8x128xf32> to vector<8x1x128xf32>
    %39 = vector.shape_cast %38 : vector<8x1x128xf32> to vector<8x128xf32>
    %cst_21 = arith.constant dense<0.000000e+00> : vector<8x128xf32>
    %40 = tpu.matmul %34, %12, %cst_21 {dimension_numbers = #tpu.dot_dimension_numbers<[1], [0], [0], [1], [0, 0, 1, 1], [], []>} : vector<8x128xf32>, vector<128x128xf32>, vector<8x128xf32> -> vector<8x128xf32>
    %41 = arith.addf %39, %40 : vector<8x128xf32>
    %42 = math.tanh %41 : vector<8x128xf32>
    %c0_22 = arith.constant 0 : index
    %c3 = arith.constant 3 : index
    %c0_23 = arith.constant 0 : index
    %43 = vector.load %arg6[%c0_22, %c3, %c0_23] : memref<8x8x128xf32, #tpu.memory_space<vmem>>, vector<8x1x128xf32>
    %44 = vector.shape_cast %43 : vector<8x1x128xf32> to vector<8x128xf32>
    %45 = vector.shape_cast %42 : vector<8x128xf32> to vector<8x1x128xf32>
    tpu.vector_store %arg6[%c0_22, %c3, %c0_23], %45 {strides = array<i32>} : memref<8x8x128xf32, #tpu.memory_space<vmem>>, vector<8x1x128xf32>,
    %46 = vector.extract_strided_slice %11 {offsets = [0, 4, 0], sizes = [8, 1, 128], strides = [1, 1, 1]} : vector<8x8x128xf32> to vector<8x1x128xf32>
    %47 = vector.shape_cast %46 : vector<8x1x128xf32> to vector<8x128xf32>
    %cst_24 = arith.constant dense<0.000000e+00> : vector<8x128xf32>
    %48 = tpu.matmul %42, %12, %cst_24 {dimension_numbers = #tpu.dot_dimension_numbers<[1], [0], [0], [1], [0, 0, 1, 1], [], []>} : vector<8x128xf32>, vector<128x128xf32>, vector<8x128xf32> -> vector<8x128xf32>
    %49 = arith.addf %47, %48 : vector<8x128xf32>
    %50 = math.tanh %49 : vector<8x128xf32>
    %c0_25 = arith.constant 0 : index
    %c4 = arith.constant 4 : index
    %c0_26 = arith.constant 0 : index
    %51 = vector.load %arg6[%c0_25, %c4, %c0_26] : memref<8x8x128xf32, #tpu.memory_space<vmem>>, vector<8x1x128xf32>
    %52 = vector.shape_cast %51 : vector<8x1x128xf32> to vector<8x128xf32>
    %53 = vector.shape_cast %50 : vector<8x128xf32> to vector<8x1x128xf32>
    tpu.vector_store %arg6[%c0_25, %c4, %c0_26], %53 {strides = array<i32>} : memref<8x8x128xf32, #tpu.memory_space<vmem>>, vector<8x1x128xf32>,
    %54 = vector.extract_strided_slice %11 {offsets = [0, 5, 0], sizes = [8, 1, 128], strides = [1, 1, 1]} : vector<8x8x128xf32> to vector<8x1x128xf32>
    %55 = vector.shape_cast %54 : vector<8x1x128xf32> to vector<8x128xf32>
    %cst_27 = arith.constant dense<0.000000e+00> : vector<8x128xf32>
    %56 = tpu.matmul %50, %12, %cst_27 {dimension_numbers = #tpu.dot_dimension_numbers<[1], [0], [0], [1], [0, 0, 1, 1], [], []>} : vector<8x128xf32>, vector<128x128xf32>, vector<8x128xf32> -> vector<8x128xf32>
    %57 = arith.addf %55, %56 : vector<8x128xf32>
    %58 = math.tanh %57 : vector<8x128xf32>
    %c0_28 = arith.constant 0 : index
    %c5 = arith.constant 5 : index
    %c0_29 = arith.constant 0 : index
    %59 = vector.load %arg6[%c0_28, %c5, %c0_29] : memref<8x8x128xf32, #tpu.memory_space<vmem>>, vector<8x1x128xf32>
    %60 = vector.shape_cast %59 : vector<8x1x128xf32> to vector<8x128xf32>
    %61 = vector.shape_cast %58 : vector<8x128xf32> to vector<8x1x128xf32>
    tpu.vector_store %arg6[%c0_28, %c5, %c0_29], %61 {strides = array<i32>} : memref<8x8x128xf32, #tpu.memory_space<vmem>>, vector<8x1x128xf32>,
    %62 = vector.extract_strided_slice %11 {offsets = [0, 6, 0], sizes = [8, 1, 128], strides = [1, 1, 1]} : vector<8x8x128xf32> to vector<8x1x128xf32>
    %63 = vector.shape_cast %62 : vector<8x1x128xf32> to vector<8x128xf32>
    %cst_30 = arith.constant dense<0.000000e+00> : vector<8x128xf32>
    %64 = tpu.matmul %58, %12, %cst_30 {dimension_numbers = #tpu.dot_dimension_numbers<[1], [0], [0], [1], [0, 0, 1, 1], [], []>} : vector<8x128xf32>, vector<128x128xf32>, vector<8x128xf32> -> vector<8x128xf32>
    %65 = arith.addf %63, %64 : vector<8x128xf32>
    %66 = math.tanh %65 : vector<8x128xf32>
    %c0_31 = arith.constant 0 : index
    %c6 = arith.constant 6 : index
    %c0_32 = arith.constant 0 : index
    %67 = vector.load %arg6[%c0_31, %c6, %c0_32] : memref<8x8x128xf32, #tpu.memory_space<vmem>>, vector<8x1x128xf32>
    %68 = vector.shape_cast %67 : vector<8x1x128xf32> to vector<8x128xf32>
    %69 = vector.shape_cast %66 : vector<8x128xf32> to vector<8x1x128xf32>
    tpu.vector_store %arg6[%c0_31, %c6, %c0_32], %69 {strides = array<i32>} : memref<8x8x128xf32, #tpu.memory_space<vmem>>, vector<8x1x128xf32>,
    %70 = vector.extract_strided_slice %11 {offsets = [0, 7, 0], sizes = [8, 1, 128], strides = [1, 1, 1]} : vector<8x8x128xf32> to vector<8x1x128xf32>
    %71 = vector.shape_cast %70 : vector<8x1x128xf32> to vector<8x128xf32>
    %cst_33 = arith.constant dense<0.000000e+00> : vector<8x128xf32>
    %72 = tpu.matmul %66, %12, %cst_33 {dimension_numbers = #tpu.dot_dimension_numbers<[1], [0], [0], [1], [0, 0, 1, 1], [], []>} : vector<8x128xf32>, vector<128x128xf32>, vector<8x128xf32> -> vector<8x128xf32>
    %73 = arith.addf %71, %72 : vector<8x128xf32>
    %74 = math.tanh %73 : vector<8x128xf32>
    %c0_34 = arith.constant 0 : index
    %c7 = arith.constant 7 : index
    %c0_35 = arith.constant 0 : index
    %75 = vector.load %arg6[%c0_34, %c7, %c0_35] : memref<8x8x128xf32, #tpu.memory_space<vmem>>, vector<8x1x128xf32>
    %76 = vector.shape_cast %75 : vector<8x1x128xf32> to vector<8x128xf32>
    %77 = vector.shape_cast %74 : vector<8x128xf32> to vector<8x1x128xf32>
    tpu.vector_store %arg6[%c0_34, %c7, %c0_35], %77 {strides = array<i32>} : memref<8x8x128xf32, #tpu.memory_space<vmem>>, vector<8x1x128xf32>,
    %c0_36 = arith.constant 0 : index
    %c0_37 = arith.constant 0 : index
    %78 = vector.load %arg7[%c0_36, %c0_37] : memref<8x128xf32, #tpu.memory_space<vmem>>, vector<8x128xf32>
    tpu.vector_store %arg7[%c0_36, %c0_37], %74 {strides = array<i32>} : memref<8x128xf32, #tpu.memory_space<vmem>>, vector<8x128xf32>,
    return
  }
  func.func @transform_0(%arg0: i32, %arg1: i32) -> (i32, i32, i32) {
    %c0_i32 = arith.constant 0 : i32
    %c0_i32_0 = arith.constant 0 : i32
    return %arg0, %arg1, %c0_i32 : i32, i32, i32
  }
  func.func @transform_1(%arg0: i32, %arg1: i32) -> (i32, i32) {
    %c0_i32 = arith.constant 0 : i32
    %c0_i32_0 = arith.constant 0 : i32
    %c0_i32_1 = arith.constant 0 : i32
    return %c0_i32, %c0_i32_0 : i32, i32
  }
  func.func @transform_2(%arg0: i32, %arg1: i32) -> (i32, i32) {
    %c0_i32 = arith.constant 0 : i32
    %c0_i32_0 = arith.constant 0 : i32
    %c0_i32_1 = arith.constant 0 : i32
    return %c0_i32, %c0_i32_0 : i32, i32
  }
  func.func @transform_3(%arg0: i32, %arg1: i32) -> (i32, i32) {
    %c0_i32 = arith.constant 0 : i32
    %c0_i32_0 = arith.constant 0 : i32
    %c0_i32_1 = arith.constant 0 : i32
    return %c0_i32, %c0_i32_0 : i32, i32
  }
  func.func @transform_4(%arg0: i32, %arg1: i32) -> (i32, i32, i32) {
    %c0_i32 = arith.constant 0 : i32
    %c0_i32_0 = arith.constant 0 : i32
    return %arg0, %arg1, %c0_i32 : i32, i32, i32
  }
}

</mosaic_0001>

<llo_original>
// kernel: encoder_rnn_forward.1
$region0: #{encoder_rnn_forward.1}
  #allocation0 [shape = 'u32[]', space=smem, size = 0x4, offset = 0x4, fixed_abs, tag = 'smem constant byte address 0x4 - core index']
  #allocation1 [shape = 'u32[144,128]{1,0:T(1,128)}', space=vmem, size = 0x12000, scoped, tag = 'internal scratch']
  #allocation2 [shape = 'f32[8,128]{1,0:T(8,128)}', space=vmem, size = 0x1000, scoped, tag = 'scratch operand']
  %s0 = inlined_call_operand.vmem [shape: f32[8,8,128], index: 0, kind: input, shape index: {}]
  %s1 = inlined_call_operand.vmem [shape: f32[128,128], index: 1, kind: input, shape index: {}]
  %s2 = inlined_call_operand.vmem [shape: f32[128,128], index: 2, kind: input, shape index: {}]
  %s3 = inlined_call_operand.vmem [shape: f32[1,128], index: 3, kind: input, shape index: {}]
  %s4 = inlined_call_operand.vmem [shape: f32[8,8,128], index: 4, kind: output, shape index: {}]
  %s5 = sld [smem:[#allocation0]]
  $region30: #{encoder_rnn_forward.1} parent=0
    _
  %s7 = ssub.s32 1, %s5
  %s8 = scalar_select 0, %s7, %s5
  // Predicated region
  $region2: #{encoder_rnn_forward.1} parent=0 // pred_check
    _
  $region3: #{encoder_rnn_forward.1} parent=0 // pred_check_branch
    %10 = sbr.rel (0) target = $region5
  $region4: #{encoder_rnn_forward.1} parent=0 // pred_region
    _
  $region5: #{encoder_rnn_forward.1} parent=0 // pred_fallthru
    _
  // Predicated region
  $region6: #{encoder_rnn_forward.1} parent=0 // pred_check
    _
  $region7: #{encoder_rnn_forward.1} parent=0 // pred_check_branch
    %12 = sbr.rel (0) target = $region9
  $region8: #{encoder_rnn_forward.1} parent=0 // pred_region
    _
  $region9: #{encoder_rnn_forward.1} parent=0 // pred_fallthru
    _
  // Predicated region
  $region10: #{encoder_rnn_forward.1} parent=0 // pred_check
    _
  $region11: #{encoder_rnn_forward.1} parent=0 // pred_check_branch
    %14 = sbr.rel (0) target = $region13
  $region12: #{encoder_rnn_forward.1} parent=0 // pred_region
    _
  $region13: #{encoder_rnn_forward.1} parent=0 // pred_fallthru
    _
  // Predicated region
  $region14: #{encoder_rnn_forward.1} parent=0 // pred_check
    _
  $region15: #{encoder_rnn_forward.1} parent=0 // pred_check_branch
    %16 = sbr.rel (0) target = $region17
  $region16: #{encoder_rnn_forward.1} parent=0 // pred_region
    _
  $region17: #{encoder_rnn_forward.1} parent=0 // pred_fallthru
    _
  %p17 = scmp.eq.s32.totalorder 0, 0
  // Predicated region
  $region18: #{encoder_rnn_forward.1} parent=0 // pred_check
    %p18 = pneg %p17
  $region19: #{encoder_rnn_forward.1} parent=0 // pred_check_branch
    %20 = sbr.rel (%p18) target = $region21
  $region20: #{encoder_rnn_forward.1} parent=0 // pred_region
    %21 = vst [vmem:[#allocation2] sm:$0xff] 0.0
  $region21: #{encoder_rnn_forward.1} parent=0 // pred_fallthru
    _
  %v22 = vld [vmem:[%s0] sm:$0xff]
  %v23 = vld [vmem:[%s0 + $0x8] sm:$0xff]
  %v24 = vld [vmem:[%s0 + $0x10] sm:$0xff]
  %v25 = vld [vmem:[%s0 + $0x18] sm:$0xff]
  %v26 = vld [vmem:[%s0 + $0x20] sm:$0xff]
  %v27 = vld [vmem:[%s0 + $0x28] sm:$0xff]
  %v28 = vld [vmem:[%s0 + $0x30] sm:$0xff]
  %v29 = vld [vmem:[%s0 + $0x38] sm:$0xff]
  %v30 = vld [vmem:[%s1] sm:$0xff]
  %v31 = vld [vmem:[%s1 + $0x8] sm:$0xff]
  %v32 = vld [vmem:[%s1 + $0x10] sm:$0xff]
  %v33 = vld [vmem:[%s1 + $0x18] sm:$0xff]
  %v34 = vld [vmem:[%s1 + $0x20] sm:$0xff]
  %v35 = vld [vmem:[%s1 + $0x28] sm:$0xff]
  %v36 = vld [vmem:[%s1 + $0x30] sm:$0xff]
  %v37 = vld [vmem:[%s1 + $0x38] sm:$0xff]
  %v38 = vld [vmem:[%s1 + $0x40] sm:$0xff]
  %v39 = vld [vmem:[%s1 + $0x48] sm:$0xff]
  %v40 = vld [vmem:[%s1 + $0x50] sm:$0xff]
  %v41 = vld [vmem:[%s1 + $0x58] sm:$0xff]
  %v42 = vld [vmem:[%s1 + $0x60] sm:$0xff]
  %v43 = vld [vmem:[%s1 + $0x68] sm:$0xff]
  %v44 = vld [vmem:[%s1 + $0x70] sm:$0xff]
  %v45 = vld [vmem:[%s1 + $0x78] sm:$0xff]
  %46 = vmatprep.subr.mxu0 0.0
  %47 = vmatpush1.msra.mxu0 %v45
  %48 = vmatprep.subr.mxu0 0.0
  %49 = vmatpush1.msra.mxu0 %v44
  %50 = vmatprep.subr.mxu0 0.0
  %51 = vmatpush1.msra.mxu0 %v43
  %52 = vmatprep.subr.mxu0 0.0
  %53 = vmatpush1.msra.mxu0 %v42
  %54 = vmatprep.subr.mxu0 0.0
  %55 = vmatpush1.msra.mxu0 %v41
  %56 = vmatprep.subr.mxu0 0.0
  %57 = vmatpush1.msra.mxu0 %v40
  %58 = vmatprep.subr.mxu0 0.0
  %59 = vmatpush1.msra.mxu0 %v39
  %60 = vmatprep.subr.mxu0 0.0
  %61 = vmatpush1.msra.mxu0 %v38
  %62 = vmatprep.subr.mxu0 0.0
  %63 = vmatpush1.msra.mxu0 %v37
  %64 = vmatprep.subr.mxu0 0.0
  %65 = vmatpush1.msra.mxu0 %v36
  %66 = vmatprep.subr.mxu0 0.0
  %67 = vmatpush1.msra.mxu0 %v35
  %68 = vmatprep.subr.mxu0 0.0
  %69 = vmatpush1.msra.mxu0 %v34
  %70 = vmatprep.subr.mxu0 0.0
  %71 = vmatpush1.msra.mxu0 %v33
  %72 = vmatprep.subr.mxu0 0.0
  %73 = vmatpush1.msra.mxu0 %v32
  %74 = vmatprep.subr.mxu0 0.0
  %75 = vmatpush1.msra.mxu0 %v31
  %76 = vmatprep.subr.mxu0 0.0
  %77 = vmatpush1.msra.mxu0 %v30
  %78 = vmatprep.subr.mxu0 0.0
  %79 = vmatpush2.msra.mxu0 0.0
  %80 = vmatprep.subr.mxu0 0.0
  %81 = vmatpush2.msra.mxu0 0.0
  %82 = vmatprep.subr.mxu0 0.0
  %83 = vmatpush2.msra.mxu0 0.0
  %84 = vmatprep.subr.mxu0 0.0
  %85 = vmatpush2.msra.mxu0 0.0
  %86 = vmatprep.subr.mxu0 0.0
  %87 = vmatpush2.msra.mxu0 0.0
  %88 = vmatprep.subr.mxu0 0.0
  %89 = vmatpush2.msra.mxu0 0.0
  %90 = vmatprep.subr.mxu0 0.0
  %91 = vmatpush2.msra.mxu0 0.0
  %92 = vmatprep.subr.mxu0 0.0
  %93 = vmatpush2.msra.mxu0 0.0
  %94 = vmatprep.subr.mxu0 0.0
  %95 = vmatpush2.msra.mxu0 0.0
  %96 = vmatprep.subr.mxu0 0.0
  %97 = vmatpush2.msra.mxu0 0.0
  %98 = vmatprep.subr.mxu0 0.0
  %99 = vmatpush2.msra.mxu0 0.0
  %100 = vmatprep.subr.mxu0 0.0
  %101 = vmatpush2.msra.mxu0 0.0
  %102 = vmatprep.subr.mxu0 0.0
  %103 = vmatpush2.msra.mxu0 0.0
  %104 = vmatprep.subr.mxu0 0.0
  %105 = vmatpush2.msra.mxu0 0.0
  %106 = vmatprep.subr.mxu0 0.0
  %107 = vmatpush2.msra.mxu0 0.0
  %108 = vmatprep.subr.mxu0 0.0
  %109 = vmatpush2.msra.mxu0 0.0
  %110 = vmatprep.mubr.f32.mxu0 0.0
  %111 = vmatmul.mubr.f32.gmra.mxu0 %v22
  %v112 = vpop.f32.mrf.mxu0
  %v113 = vadd.f32 0.0, %v112
  %v114 = vpop.f32.mrf.mxu0
  %115 = vmatprep.mubr.f32.mxu0 0.0
  %116 = vmatmul.mubr.f32.gmra.mxu0 %v23
  %v117 = vpop.f32.mrf.mxu0
  %v118 = vadd.f32 0.0, %v117
  %v119 = vpop.f32.mrf.mxu0
  %120 = vmatprep.mubr.f32.mxu0 0.0
  %121 = vmatmul.mubr.f32.gmra.mxu0 %v24
  %v122 = vpop.f32.mrf.mxu0
  %v123 = vadd.f32 0.0, %v122
  %v124 = vpop.f32.mrf.mxu0
  %125 = vmatprep.mubr.f32.mxu0 0.0
  %126 = vmatmul.mubr.f32.gmra.mxu0 %v25
  %v127 = vpop.f32.mrf.mxu0
  %v128 = vadd.f32 0.0, %v127
  %v129 = vpop.f32.mrf.mxu0
  %130 = vmatprep.mubr.f32.mxu0 0.0
  %131 = vmatmul.mubr.f32.gmra.mxu0 %v26
  %v132 = vpop.f32.mrf.mxu0
  %v133 = vadd.f32 0.0, %v132
  %v134 = vpop.f32.mrf.mxu0
  %135 = vmatprep.mubr.f32.mxu0 0.0
  %136 = vmatmul.mubr.f32.gmra.mxu0 %v27
  %v137 = vpop.f32.mrf.mxu0
  %v138 = vadd.f32 0.0, %v137
  %v139 = vpop.f32.mrf.mxu0
  %140 = vmatprep.mubr.f32.mxu0 0.0
  %141 = vmatmul.mubr.f32.gmra.mxu0 %v28
  %v142 = vpop.f32.mrf.mxu0
  %v143 = vadd.f32 0.0, %v142
  %v144 = vpop.f32.mrf.mxu0
  %145 = vmatprep.mubr.f32.mxu0 0.0
  %146 = vmatmul.mubr.f32.gmra.mxu0 %v29
  %v147 = vpop.f32.mrf.mxu0
  %v148 = vadd.f32 0.0, %v147
  %v149 = vpop.f32.mrf.mxu0
  %150 = vdwg.mxu0
  %v151 = vld [vmem:[%s3] sm:$0x1]
  %v153 = vlaneseq
  %v154 = vshrl.u32 %v153, 7
  %v155 = vsub.s32 0, %v154
  %v156 = vrot.slane %v151, %v155
  %v158 = vadd.f32 %v113, %v156
  %v159 = vadd.f32 %v118, %v156
  %v160 = vadd.f32 %v123, %v156
  %v161 = vadd.f32 %v128, %v156
  %v162 = vadd.f32 %v133, %v156
  %v163 = vadd.f32 %v138, %v156
  %v164 = vadd.f32 %v143, %v156
  %v165 = vadd.f32 %v148, %v156
  %v166 = vld [vmem:[%s2] sm:$0xff]
  %v167 = vld [vmem:[%s2 + $0x8] sm:$0xff]
  %v168 = vld [vmem:[%s2 + $0x10] sm:$0xff]
  %v169 = vld [vmem:[%s2 + $0x18] sm:$0xff]
  %v170 = vld [vmem:[%s2 + $0x20] sm:$0xff]
  %v171 = vld [vmem:[%s2 + $0x28] sm:$0xff]
  %v172 = vld [vmem:[%s2 + $0x30] sm:$0xff]
  %v173 = vld [vmem:[%s2 + $0x38] sm:$0xff]
  %v174 = vld [vmem:[%s2 + $0x40] sm:$0xff]
  %v175 = vld [vmem:[%s2 + $0x48] sm:$0xff]
  %v176 = vld [vmem:[%s2 + $0x50] sm:$0xff]
  %v177 = vld [vmem:[%s2 + $0x58] sm:$0xff]
  %v178 = vld [vmem:[%s2 + $0x60] sm:$0xff]
  %v179 = vld [vmem:[%s2 + $0x68] sm:$0xff]
  %v180 = vld [vmem:[%s2 + $0x70] sm:$0xff]
  %v181 = vld [vmem:[%s2 + $0x78] sm:$0xff]
  %v182 = vld [vmem:[#allocation2] sm:$0xff]
  %183 = vmatprep.subr.mxu0 0.0
  %184 = vmatpush1.msra.mxu0 %v181
  %185 = vmatprep.subr.mxu0 0.0
  %186 = vmatpush1.msra.mxu0 %v180
  %187 = vmatprep.subr.mxu0 0.0
  %188 = vmatpush1.msra.mxu0 %v179
  %189 = vmatprep.subr.mxu0 0.0
  %190 = vmatpush1.msra.mxu0 %v178
  %191 = vmatprep.subr.mxu0 0.0
  %192 = vmatpush1.msra.mxu0 %v177
  %193 = vmatprep.subr.mxu0 0.0
  %194 = vmatpush1.msra.mxu0 %v176
  %195 = vmatprep.subr.mxu0 0.0
  %196 = vmatpush1.msra.mxu0 %v175
  %197 = vmatprep.subr.mxu0 0.0
  %198 = vmatpush1.msra.mxu0 %v174
  %199 = vmatprep.subr.mxu0 0.0
  %200 = vmatpush1.msra.mxu0 %v173
  %201 = vmatprep.subr.mxu0 0.0
  %202 = vmatpush1.msra.mxu0 %v172
  %203 = vmatprep.subr.mxu0 0.0
  %204 = vmatpush1.msra.mxu0 %v171
  %205 = vmatprep.subr.mxu0 0.0
  %206 = vmatpush1.msra.mxu0 %v170
  %207 = vmatprep.subr.mxu0 0.0
  %208 = vmatpush1.msra.mxu0 %v169
  %209 = vmatprep.subr.mxu0 0.0
  %210 = vmatpush1.msra.mxu0 %v168
  %211 = vmatprep.subr.mxu0 0.0
  %212 = vmatpush1.msra.mxu0 %v167
  %213 = vmatprep.subr.mxu0 0.0
  %214 = vmatpush1.msra.mxu0 %v166
  %215 = vmatprep.subr.mxu0 0.0
  %216 = vmatpush2.msra.mxu0 0.0
  %217 = vmatprep.subr.mxu0 0.0
  %218 = vmatpush2.msra.mxu0 0.0
  %219 = vmatprep.subr.mxu0 0.0
  %220 = vmatpush2.msra.mxu0 0.0
  %221 = vmatprep.subr.mxu0 0.0
  %222 = vmatpush2.msra.mxu0 0.0
  %223 = vmatprep.subr.mxu0 0.0
  %224 = vmatpush2.msra.mxu0 0.0
  %225 = vmatprep.subr.mxu0 0.0
  %226 = vmatpush2.msra.mxu0 0.0
  %227 = vmatprep.subr.mxu0 0.0
  %228 = vmatpush2.msra.mxu0 0.0
  %229 = vmatprep.subr.mxu0 0.0
  %230 = vmatpush2.msra.mxu0 0.0
  %231 = vmatprep.subr.mxu0 0.0
  %232 = vmatpush2.msra.mxu0 0.0
  %233 = vmatprep.subr.mxu0 0.0
  %234 = vmatpush2.msra.mxu0 0.0
  %235 = vmatprep.subr.mxu0 0.0
  %236 = vmatpush2.msra.mxu0 0.0
  %237 = vmatprep.subr.mxu0 0.0
  %238 = vmatpush2.msra.mxu0 0.0
  %239 = vmatprep.subr.mxu0 0.0
  %240 = vmatpush2.msra.mxu0 0.0
  %241 = vmatprep.subr.mxu0 0.0
  %242 = vmatpush2.msra.mxu0 0.0
  %243 = vmatprep.subr.mxu0 0.0
  %244 = vmatpush2.msra.mxu0 0.0
  %245 = vmatprep.subr.mxu0 0.0
  %246 = vmatpush2.msra.mxu0 0.0
  %247 = vmatprep.mubr.f32.mxu0 0.0
  %248 = vmatmul.mubr.f32.gmra.mxu0 %v182
  %v249 = vpop.f32.mrf.mxu0
  %v250 = vadd.f32 0.0, %v249
  %v251 = vpop.f32.mrf.mxu0
  %252 = vdwg.mxu0
  %v254 = vrot.slane %v250, 1
  %v255 = vrot.slane %v250, 2
  %v256 = vrot.slane %v250, 3
  %v257 = vrot.slane %v250, 4
  %v258 = vrot.slane %v250, 5
  %v259 = vrot.slane %v250, 6
  %v260 = vrot.slane %v250, 7
  %v269 = vadd.f32 %v158, %v250
  %v270 = vadd.f32 %v159, %v254
  %v271 = vadd.f32 %v160, %v255
  %v272 = vadd.f32 %v161, %v256
  %v273 = vadd.f32 %v162, %v257
  %v274 = vadd.f32 %v163, %v258
  %v275 = vadd.f32 %v164, %v259
  %v276 = vadd.f32 %v165, %v260
  %v277 = vtanh.pop %v269
  %v278 = vtanh.pop %v270
  %v279 = vtanh.pop %v271
  %v280 = vtanh.pop %v272
  %v281 = vtanh.pop %v273
  %v282 = vtanh.pop %v274
  %v283 = vtanh.pop %v275
  %v284 = vtanh.pop %v276
  %285 = vst [vmem:[%s4] sm:$0x1] %v277
  %286 = vst [vmem:[%s4 + $0x8] sm:$0x1] %v278
  %287 = vst [vmem:[%s4 + $0x10] sm:$0x1] %v279
  %288 = vst [vmem:[%s4 + $0x18] sm:$0x1] %v280
  %289 = vst [vmem:[%s4 + $0x20] sm:$0x1] %v281
  %290 = vst [vmem:[%s4 + $0x28] sm:$0x1] %v282
  %291 = vst [vmem:[%s4 + $0x30] sm:$0x1] %v283
  %292 = vst [vmem:[%s4 + $0x38] sm:$0x1] %v284
  %v301 = vrot.slane %v278, 7
  %vm302 = vcmask 1041409
  %v303 = vsel %vm302, %v301, %v277
  %v304 = vrot.slane %v279, 6
  %vm305 = vcmask 1042434
  %v306 = vsel %vm305, %v304, %v303
  %v307 = vrot.slane %v280, 5
  %vm308 = vcmask 1043459
  %v309 = vsel %vm308, %v307, %v306
  %v310 = vrot.slane %v281, 4
  %vm311 = vcmask 1044484
  %v312 = vsel %vm311, %v310, %v309
  %v313 = vrot.slane %v282, 3
  %vm314 = vcmask 1045509
  %v315 = vsel %vm314, %v313, %v312
  %v316 = vrot.slane %v283, 2
  %vm317 = vcmask 1046534
  %v318 = vsel %vm317, %v316, %v315
  %v319 = vrot.slane %v284, 1
  %vm320 = vcmask 1047559
  %v321 = vsel %vm320, %v319, %v318
  %323 = vmatprep.subr.mxu0 0.0
  %324 = vmatpush1.msra.mxu0 %v181
  %325 = vmatprep.subr.mxu0 0.0
  %326 = vmatpush1.msra.mxu0 %v180
  %327 = vmatprep.subr.mxu0 0.0
  %328 = vmatpush1.msra.mxu0 %v179
  %329 = vmatprep.subr.mxu0 0.0
  %330 = vmatpush1.msra.mxu0 %v178
  %331 = vmatprep.subr.mxu0 0.0
  %332 = vmatpush1.msra.mxu0 %v177
  %333 = vmatprep.subr.mxu0 0.0
  %334 = vmatpush1.msra.mxu0 %v176
  %335 = vmatprep.subr.mxu0 0.0
  %336 = vmatpush1.msra.mxu0 %v175
  %337 = vmatprep.subr.mxu0 0.0
  %338 = vmatpush1.msra.mxu0 %v174
  %339 = vmatprep.subr.mxu0 0.0
  %340 = vmatpush1.msra.mxu0 %v173
  %341 = vmatprep.subr.mxu0 0.0
  %342 = vmatpush1.msra.mxu0 %v172
  %343 = vmatprep.subr.mxu0 0.0
  %344 = vmatpush1.msra.mxu0 %v171
  %345 = vmatprep.subr.mxu0 0.0
  %346 = vmatpush1.msra.mxu0 %v170
  %347 = vmatprep.subr.mxu0 0.0
  %348 = vmatpush1.msra.mxu0 %v169
  %349 = vmatprep.subr.mxu0 0.0
  %350 = vmatpush1.msra.mxu0 %v168
  %351 = vmatprep.subr.mxu0 0.0
  %352 = vmatpush1.msra.mxu0 %v167
  %353 = vmatprep.subr.mxu0 0.0
  %354 = vmatpush1.msra.mxu0 %v166
  %355 = vmatprep.subr.mxu0 0.0
  %356 = vmatpush2.msra.mxu0 0.0
  %357 = vmatprep.subr.mxu0 0.0
  %358 = vmatpush2.msra.mxu0 0.0
  %359 = vmatprep.subr.mxu0 0.0
  %360 = vmatpush2.msra.mxu0 0.0
  %361 = vmatprep.subr.mxu0 0.0
  %362 = vmatpush2.msra.mxu0 0.0
  %363 = vmatprep.subr.mxu0 0.0
  %364 = vmatpush2.msra.mxu0 0.0
  %365 = vmatprep.subr.mxu0 0.0
  %366 = vmatpush2.msra.mxu0 0.0
  %367 = vmatprep.subr.mxu0 0.0
  %368 = vmatpush2.msra.mxu0 0.0
  %369 = vmatprep.subr.mxu0 0.0
  %370 = vmatpush2.msra.mxu0 0.0
  %371 = vmatprep.subr.mxu0 0.0
  %372 = vmatpush2.msra.mxu0 0.0
  %373 = vmatprep.subr.mxu0 0.0
  %374 = vmatpush2.msra.mxu0 0.0
  %375 = vmatprep.subr.mxu0 0.0
  %376 = vmatpush2.msra.mxu0 0.0
  %377 = vmatprep.subr.mxu0 0.0
  %378 = vmatpush2.msra.mxu0 0.0
  %379 = vmatprep.subr.mxu0 0.0
  %380 = vmatpush2.msra.mxu0 0.0
  %381 = vmatprep.subr.mxu0 0.0
  %382 = vmatpush2.msra.mxu0 0.0
  %383 = vmatprep.subr.mxu0 0.0
  %384 = vmatpush2.msra.mxu0 0.0
  %385 = vmatprep.subr.mxu0 0.0
  %386 = vmatpush2.msra.mxu0 0.0
  %387 = vmatprep.mubr.f32.mxu0 0.0
  %388 = vmatmul.mubr.f32.gmra.mxu0 %v321
  %v389 = vpop.f32.mrf.mxu0
  %v390 = vadd.f32 0.0, %v389
  %v391 = vpop.f32.mrf.mxu0
  %392 = vdwg.mxu0
  %v394 = vrot.slane %v390, 7
  %v395 = vrot.slane %v390, 1
  %v396 = vrot.slane %v390, 2
  %v397 = vrot.slane %v390, 3
  %v398 = vrot.slane %v390, 4
  %v399 = vrot.slane %v390, 5
  %v400 = vrot.slane %v390, 6
  %v409 = vadd.f32 %v158, %v394
  %v410 = vadd.f32 %v159, %v390
  %v411 = vadd.f32 %v160, %v395
  %v412 = vadd.f32 %v161, %v396
  %v413 = vadd.f32 %v162, %v397
  %v414 = vadd.f32 %v163, %v398
  %v415 = vadd.f32 %v164, %v399
  %v416 = vadd.f32 %v165, %v400
  %v417 = vtanh.pop %v409
  %v418 = vtanh.pop %v410
  %v419 = vtanh.pop %v411
  %v420 = vtanh.pop %v412
  %v421 = vtanh.pop %v413
  %v422 = vtanh.pop %v414
  %v423 = vtanh.pop %v415
  %v424 = vtanh.pop %v416
  %425 = vst [vmem:[%s4] sm:$0x2] %v417
  %426 = vst [vmem:[%s4 + $0x8] sm:$0x2] %v418
  %427 = vst [vmem:[%s4 + $0x10] sm:$0x2] %v419
  %428 = vst [vmem:[%s4 + $0x18] sm:$0x2] %v420
  %429 = vst [vmem:[%s4 + $0x20] sm:$0x2] %v421
  %430 = vst [vmem:[%s4 + $0x28] sm:$0x2] %v422
  %431 = vst [vmem:[%s4 + $0x30] sm:$0x2] %v423
  %432 = vst [vmem:[%s4 + $0x38] sm:$0x2] %v424
  %v441 = vrot.slane %v417, 1
  %v442 = vsel %vm302, %v418, %v441
  %v443 = vrot.slane %v419, 7
  %v444 = vsel %vm305, %v443, %v442
  %v445 = vrot.slane %v420, 6
  %v446 = vsel %vm308, %v445, %v444
  %v447 = vrot.slane %v421, 5
  %v448 = vsel %vm311, %v447, %v446
  %v449 = vrot.slane %v422, 4
  %v450 = vsel %vm314, %v449, %v448
  %v451 = vrot.slane %v423, 3
  %v452 = vsel %vm317, %v451, %v450
  %v453 = vrot.slane %v424, 2
  %v454 = vsel %vm320, %v453, %v452
  %456 = vmatprep.subr.mxu0 0.0
  %457 = vmatpush1.msra.mxu0 %v181
  %458 = vmatprep.subr.mxu0 0.0
  %459 = vmatpush1.msra.mxu0 %v180
  %460 = vmatprep.subr.mxu0 0.0
  %461 = vmatpush1.msra.mxu0 %v179
  %462 = vmatprep.subr.mxu0 0.0
  %463 = vmatpush1.msra.mxu0 %v178
  %464 = vmatprep.subr.mxu0 0.0
  %465 = vmatpush1.msra.mxu0 %v177
  %466 = vmatprep.subr.mxu0 0.0
  %467 = vmatpush1.msra.mxu0 %v176
  %468 = vmatprep.subr.mxu0 0.0
  %469 = vmatpush1.msra.mxu0 %v175
  %470 = vmatprep.subr.mxu0 0.0
  %471 = vmatpush1.msra.mxu0 %v174
  %472 = vmatprep.subr.mxu0 0.0
  %473 = vmatpush1.msra.mxu0 %v173
  %474 = vmatprep.subr.mxu0 0.0
  %475 = vmatpush1.msra.mxu0 %v172
  %476 = vmatprep.subr.mxu0 0.0
  %477 = vmatpush1.msra.mxu0 %v171
  %478 = vmatprep.subr.mxu0 0.0
  %479 = vmatpush1.msra.mxu0 %v170
  %480 = vmatprep.subr.mxu0 0.0
  %481 = vmatpush1.msra.mxu0 %v169
  %482 = vmatprep.subr.mxu0 0.0
  %483 = vmatpush1.msra.mxu0 %v168
  %484 = vmatprep.subr.mxu0 0.0
  %485 = vmatpush1.msra.mxu0 %v167
  %486 = vmatprep.subr.mxu0 0.0
  %487 = vmatpush1.msra.mxu0 %v166
  %488 = vmatprep.subr.mxu0 0.0
  %489 = vmatpush2.msra.mxu0 0.0
  %490 = vmatprep.subr.mxu0 0.0
  %491 = vmatpush2.msra.mxu0 0.0
  %492 = vmatprep.subr.mxu0 0.0
  %493 = vmatpush2.msra.mxu0 0.0
  %494 = vmatprep.subr.mxu0 0.0
  %495 = vmatpush2.msra.mxu0 0.0
  %496 = vmatprep.subr.mxu0 0.0
  %497 = vmatpush2.msra.mxu0 0.0
  %498 = vmatprep.subr.mxu0 0.0
  %499 = vmatpush2.msra.mxu0 0.0
  %500 = vmatprep.subr.mxu0 0.0
  %501 = vmatpush2.msra.mxu0 0.0
  %502 = vmatprep.subr.mxu0 0.0
  %503 = vmatpush2.msra.mxu0 0.0
  %504 = vmatprep.subr.mxu0 0.0
  %505 = vmatpush2.msra.mxu0 0.0
  %506 = vmatprep.subr.mxu0 0.0
  %507 = vmatpush2.msra.mxu0 0.0
  %508 = vmatprep.subr.mxu0 0.0
  %509 = vmatpush2.msra.mxu0 0.0
  %510 = vmatprep.subr.mxu0 0.0
  %511 = vmatpush2.msra.mxu0 0.0
  %512 = vmatprep.subr.mxu0 0.0
  %513 = vmatpush2.msra.mxu0 0.0
  %514 = vmatprep.subr.mxu0 0.0
  %515 = vmatpush2.msra.mxu0 0.0
  %516 = vmatprep.subr.mxu0 0.0
  %517 = vmatpush2.msra.mxu0 0.0
  %518 = vmatprep.subr.mxu0 0.0
  %519 = vmatpush2.msra.mxu0 0.0
  %520 = vmatprep.mubr.f32.mxu0 0.0
  %521 = vmatmul.mubr.f32.gmra.mxu0 %v454
  %v522 = vpop.f32.mrf.mxu0
  %v523 = vadd.f32 0.0, %v522
  %v524 = vpop.f32.mrf.mxu0
  %525 = vdwg.mxu0
  %v527 = vrot.slane %v523, 6
  %v528 = vrot.slane %v523, 7
  %v529 = vrot.slane %v523, 1
  %v530 = vrot.slane %v523, 2
  %v531 = vrot.slane %v523, 3
  %v532 = vrot.slane %v523, 4
  %v533 = vrot.slane %v523, 5
  %v542 = vadd.f32 %v158, %v527
  %v543 = vadd.f32 %v159, %v528
  %v544 = vadd.f32 %v160, %v523
  %v545 = vadd.f32 %v161, %v529
  %v546 = vadd.f32 %v162, %v530
  %v547 = vadd.f32 %v163, %v531
  %v548 = vadd.f32 %v164, %v532
  %v549 = vadd.f32 %v165, %v533
  %v550 = vtanh.pop %v542
  %v551 = vtanh.pop %v543
  %v552 = vtanh.pop %v544
  %v553 = vtanh.pop %v545
  %v554 = vtanh.pop %v546
  %v555 = vtanh.pop %v547
  %v556 = vtanh.pop %v548
  %v557 = vtanh.pop %v549
  %558 = vst [vmem:[%s4] sm:$0x4] %v550
  %559 = vst [vmem:[%s4 + $0x8] sm:$0x4] %v551
  %560 = vst [vmem:[%s4 + $0x10] sm:$0x4] %v552
  %561 = vst [vmem:[%s4 + $0x18] sm:$0x4] %v553
  %562 = vst [vmem:[%s4 + $0x20] sm:$0x4] %v554
  %563 = vst [vmem:[%s4 + $0x28] sm:$0x4] %v555
  %564 = vst [vmem:[%s4 + $0x30] sm:$0x4] %v556
  %565 = vst [vmem:[%s4 + $0x38] sm:$0x4] %v557
  %v574 = vrot.slane %v550, 2
  %v575 = vrot.slane %v551, 1
  %v576 = vsel %vm302, %v575, %v574
  %v577 = vsel %vm305, %v552, %v576
  %v578 = vrot.slane %v553, 7
  %v579 = vsel %vm308, %v578, %v577
  %v580 = vrot.slane %v554, 6
  %v581 = vsel %vm311, %v580, %v579
  %v582 = vrot.slane %v555, 5
  %v583 = vsel %vm314, %v582, %v581
  %v584 = vrot.slane %v556, 4
  %v585 = vsel %vm317, %v584, %v583
  %v586 = vrot.slane %v557, 3
  %v587 = vsel %vm320, %v586, %v585
  %589 = vmatprep.subr.mxu0 0.0
  %590 = vmatpush1.msra.mxu0 %v181
  %591 = vmatprep.subr.mxu0 0.0
  %592 = vmatpush1.msra.mxu0 %v180
  %593 = vmatprep.subr.mxu0 0.0
  %594 = vmatpush1.msra.mxu0 %v179
  %595 = vmatprep.subr.mxu0 0.0
  %596 = vmatpush1.msra.mxu0 %v178
  %597 = vmatprep.subr.mxu0 0.0
  %598 = vmatpush1.msra.mxu0 %v177
  %599 = vmatprep.subr.mxu0 0.0
  %600 = vmatpush1.msra.mxu0 %v176
  %601 = vmatprep.subr.mxu0 0.0
  %602 = vmatpush1.msra.mxu0 %v175
  %603 = vmatprep.subr.mxu0 0.0
  %604 = vmatpush1.msra.mxu0 %v174
  %605 = vmatprep.subr.mxu0 0.0
  %606 = vmatpush1.msra.mxu0 %v173
  %607 = vmatprep.subr.mxu0 0.0
  %608 = vmatpush1.msra.mxu0 %v172
  %609 = vmatprep.subr.mxu0 0.0
  %610 = vmatpush1.msra.mxu0 %v171
  %611 = vmatprep.subr.mxu0 0.0
  %612 = vmatpush1.msra.mxu0 %v170
  %613 = vmatprep.subr.mxu0 0.0
  %614 = vmatpush1.msra.mxu0 %v169
  %615 = vmatprep.subr.mxu0 0.0
  %616 = vmatpush1.msra.mxu0 %v168
  %617 = vmatprep.subr.mxu0 0.0
  %618 = vmatpush1.msra.mxu0 %v167
  %619 = vmatprep.subr.mxu0 0.0
  %620 = vmatpush1.msra.mxu0 %v166
  %621 = vmatprep.subr.mxu0 0.0
  %622 = vmatpush2.msra.mxu0 0.0
  %623 = vmatprep.subr.mxu0 0.0
  %624 = vmatpush2.msra.mxu0 0.0
  %625 = vmatprep.subr.mxu0 0.0
  %626 = vmatpush2.msra.mxu0 0.0
  %627 = vmatprep.subr.mxu0 0.0
  %628 = vmatpush2.msra.mxu0 0.0
  %629 = vmatprep.subr.mxu0 0.0
  %630 = vmatpush2.msra.mxu0 0.0
  %631 = vmatprep.subr.mxu0 0.0
  %632 = vmatpush2.msra.mxu0 0.0
  %633 = vmatprep.subr.mxu0 0.0
  %634 = vmatpush2.msra.mxu0 0.0
  %635 = vmatprep.subr.mxu0 0.0
  %636 = vmatpush2.msra.mxu0 0.0
  %637 = vmatprep.subr.mxu0 0.0
  %638 = vmatpush2.msra.mxu0 0.0
  %639 = vmatprep.subr.mxu0 0.0
  %640 = vmatpush2.msra.mxu0 0.0
  %641 = vmatprep.subr.mxu0 0.0
  %642 = vmatpush2.msra.mxu0 0.0
  %643 = vmatprep.subr.mxu0 0.0
  %644 = vmatpush2.msra.mxu0 0.0
  %645 = vmatprep.subr.mxu0 0.0
  %646 = vmatpush2.msra.mxu0 0.0
  %647 = vmatprep.subr.mxu0 0.0
  %648 = vmatpush2.msra.mxu0 0.0
  %649 = vmatprep.subr.mxu0 0.0
  %650 = vmatpush2.msra.mxu0 0.0
  %651 = vmatprep.subr.mxu0 0.0
  %652 = vmatpush2.msra.mxu0 0.0
  %653 = vmatprep.mubr.f32.mxu0 0.0
  %654 = vmatmul.mubr.f32.gmra.mxu0 %v587
  %v655 = vpop.f32.mrf.mxu0
  %v656 = vadd.f32 0.0, %v655
  %v657 = vpop.f32.mrf.mxu0
  %658 = vdwg.mxu0
  %v660 = vrot.slane %v656, 5
  %v661 = vrot.slane %v656, 6
  %v662 = vrot.slane %v656, 7
  %v663 = vrot.slane %v656, 1
  %v664 = vrot.slane %v656, 2
  %v665 = vrot.slane %v656, 3
  %v666 = vrot.slane %v656, 4
  %v675 = vadd.f32 %v158, %v660
  %v676 = vadd.f32 %v159, %v661
  %v677 = vadd.f32 %v160, %v662
  %v678 = vadd.f32 %v161, %v656
  %v679 = vadd.f32 %v162, %v663
  %v680 = vadd.f32 %v163, %v664
  %v681 = vadd.f32 %v164, %v665
  %v682 = vadd.f32 %v165, %v666
  %v683 = vtanh.pop %v675
  %v684 = vtanh.pop %v676
  %v685 = vtanh.pop %v677
  %v686 = vtanh.pop %v678
  %v687 = vtanh.pop %v679
  %v688 = vtanh.pop %v680
  %v689 = vtanh.pop %v681
  %v690 = vtanh.pop %v682
  %691 = vst [vmem:[%s4] sm:$0x8] %v683
  %692 = vst [vmem:[%s4 + $0x8] sm:$0x8] %v684
  %693 = vst [vmem:[%s4 + $0x10] sm:$0x8] %v685
  %694 = vst [vmem:[%s4 + $0x18] sm:$0x8] %v686
  %695 = vst [vmem:[%s4 + $0x20] sm:$0x8] %v687
  %696 = vst [vmem:[%s4 + $0x28] sm:$0x8] %v688
  %697 = vst [vmem:[%s4 + $0x30] sm:$0x8] %v689
  %698 = vst [vmem:[%s4 + $0x38] sm:$0x8] %v690
  %v707 = vrot.slane %v683, 3
  %v708 = vrot.slane %v684, 2
  %v709 = vsel %vm302, %v708, %v707
  %v710 = vrot.slane %v685, 1
  %v711 = vsel %vm305, %v710, %v709
  %v712 = vsel %vm308, %v686, %v711
  %v713 = vrot.slane %v687, 7
  %v714 = vsel %vm311, %v713, %v712
  %v715 = vrot.slane %v688, 6
  %v716 = vsel %vm314, %v715, %v714
  %v717 = vrot.slane %v689, 5
  %v718 = vsel %vm317, %v717, %v716
  %v719 = vrot.slane %v690, 4
  %v720 = vsel %vm320, %v719, %v718
  %722 = vmatprep.subr.mxu0 0.0
  %723 = vmatpush1.msra.mxu0 %v181
  %724 = vmatprep.subr.mxu0 0.0
  %725 = vmatpush1.msra.mxu0 %v180
  %726 = vmatprep.subr.mxu0 0.0
  %727 = vmatpush1.msra.mxu0 %v179
  %728 = vmatprep.subr.mxu0 0.0
  %729 = vmatpush1.msra.mxu0 %v178
  %730 = vmatprep.subr.mxu0 0.0
  %731 = vmatpush1.msra.mxu0 %v177
  %732 = vmatprep.subr.mxu0 0.0
  %733 = vmatpush1.msra.mxu0 %v176
  %734 = vmatprep.subr.mxu0 0.0
  %735 = vmatpush1.msra.mxu0 %v175
  %736 = vmatprep.subr.mxu0 0.0
  %737 = vmatpush1.msra.mxu0 %v174
  %738 = vmatprep.subr.mxu0 0.0
  %739 = vmatpush1.msra.mxu0 %v173
  %740 = vmatprep.subr.mxu0 0.0
  %741 = vmatpush1.msra.mxu0 %v172
  %742 = vmatprep.subr.mxu0 0.0
  %743 = vmatpush1.msra.mxu0 %v171
  %744 = vmatprep.subr.mxu0 0.0
  %745 = vmatpush1.msra.mxu0 %v170
  %746 = vmatprep.subr.mxu0 0.0
  %747 = vmatpush1.msra.mxu0 %v169
  %748 = vmatprep.subr.mxu0 0.0
  %749 = vmatpush1.msra.mxu0 %v168
  %750 = vmatprep.subr.mxu0 0.0
  %751 = vmatpush1.msra.mxu0 %v167
  %752 = vmatprep.subr.mxu0 0.0
  %753 = vmatpush1.msra.mxu0 %v166
  %754 = vmatprep.subr.mxu0 0.0
  %755 = vmatpush2.msra.mxu0 0.0
  %756 = vmatprep.subr.mxu0 0.0
  %757 = vmatpush2.msra.mxu0 0.0
  %758 = vmatprep.subr.mxu0 0.0
  %759 = vmatpush2.msra.mxu0 0.0
  %760 = vmatprep.subr.mxu0 0.0
  %761 = vmatpush2.msra.mxu0 0.0
  %762 = vmatprep.subr.mxu0 0.0
  %763 = vmatpush2.msra.mxu0 0.0
  %764 = vmatprep.subr.mxu0 0.0
  %765 = vmatpush2.msra.mxu0 0.0
  %766 = vmatprep.subr.mxu0 0.0
  %767 = vmatpush2.msra.mxu0 0.0
  %768 = vmatprep.subr.mxu0 0.0
  %769 = vmatpush2.msra.mxu0 0.0
  %770 = vmatprep.subr.mxu0 0.0
  %771 = vmatpush2.msra.mxu0 0.0
  %772 = vmatprep.subr.mxu0 0.0
  %773 = vmatpush2.msra.mxu0 0.0
  %774 = vmatprep.subr.mxu0 0.0
  %775 = vmatpush2.msra.mxu0 0.0
  %776 = vmatprep.subr.mxu0 0.0
  %777 = vmatpush2.msra.mxu0 0.0
  %778 = vmatprep.subr.mxu0 0.0
  %779 = vmatpush2.msra.mxu0 0.0
  %780 = vmatprep.subr.mxu0 0.0
  %781 = vmatpush2.msra.mxu0 0.0
  %782 = vmatprep.subr.mxu0 0.0
  %783 = vmatpush2.msra.mxu0 0.0
  %784 = vmatprep.subr.mxu0 0.0
  %785 = vmatpush2.msra.mxu0 0.0
  %786 = vmatprep.mubr.f32.mxu0 0.0
  %787 = vmatmul.mubr.f32.gmra.mxu0 %v720
  %v788 = vpop.f32.mrf.mxu0
  %v789 = vadd.f32 0.0, %v788
  %v790 = vpop.f32.mrf.mxu0
  %791 = vdwg.mxu0
  %v793 = vrot.slane %v789, 4
  %v794 = vrot.slane %v789, 5
  %v795 = vrot.slane %v789, 6
  %v796 = vrot.slane %v789, 7
  %v797 = vrot.slane %v789, 1
  %v798 = vrot.slane %v789, 2
  %v799 = vrot.slane %v789, 3
  %v808 = vadd.f32 %v158, %v793
  %v809 = vadd.f32 %v159, %v794
  %v810 = vadd.f32 %v160, %v795
  %v811 = vadd.f32 %v161, %v796
  %v812 = vadd.f32 %v162, %v789
  %v813 = vadd.f32 %v163, %v797
  %v814 = vadd.f32 %v164, %v798
  %v815 = vadd.f32 %v165, %v799
  %v816 = vtanh.pop %v808
  %v817 = vtanh.pop %v809
  %v818 = vtanh.pop %v810
  %v819 = vtanh.pop %v811
  %v820 = vtanh.pop %v812
  %v821 = vtanh.pop %v813
  %v822 = vtanh.pop %v814
  %v823 = vtanh.pop %v815
  %824 = vst [vmem:[%s4] sm:$0x10] %v816
  %825 = vst [vmem:[%s4 + $0x8] sm:$0x10] %v817
  %826 = vst [vmem:[%s4 + $0x10] sm:$0x10] %v818
  %827 = vst [vmem:[%s4 + $0x18] sm:$0x10] %v819
  %828 = vst [vmem:[%s4 + $0x20] sm:$0x10] %v820
  %829 = vst [vmem:[%s4 + $0x28] sm:$0x10] %v821
  %830 = vst [vmem:[%s4 + $0x30] sm:$0x10] %v822
  %831 = vst [vmem:[%s4 + $0x38] sm:$0x10] %v823
  %v840 = vrot.slane %v816, 4
  %v841 = vrot.slane %v817, 3
  %v842 = vsel %vm302, %v841, %v840
  %v843 = vrot.slane %v818, 2
  %v844 = vsel %vm305, %v843, %v842
  %v845 = vrot.slane %v819, 1
  %v846 = vsel %vm308, %v845, %v844
  %v847 = vsel %vm311, %v820, %v846
  %v848 = vrot.slane %v821, 7
  %v849 = vsel %vm314, %v848, %v847
  %v850 = vrot.slane %v822, 6
  %v851 = vsel %vm317, %v850, %v849
  %v852 = vrot.slane %v823, 5
  %v853 = vsel %vm320, %v852, %v851
  %855 = vmatprep.subr.mxu0 0.0
  %856 = vmatpush1.msra.mxu0 %v181
  %857 = vmatprep.subr.mxu0 0.0
  %858 = vmatpush1.msra.mxu0 %v180
  %859 = vmatprep.subr.mxu0 0.0
  %860 = vmatpush1.msra.mxu0 %v179
  %861 = vmatprep.subr.mxu0 0.0
  %862 = vmatpush1.msra.mxu0 %v178
  %863 = vmatprep.subr.mxu0 0.0
  %864 = vmatpush1.msra.mxu0 %v177
  %865 = vmatprep.subr.mxu0 0.0
  %866 = vmatpush1.msra.mxu0 %v176
  %867 = vmatprep.subr.mxu0 0.0
  %868 = vmatpush1.msra.mxu0 %v175
  %869 = vmatprep.subr.mxu0 0.0
  %870 = vmatpush1.msra.mxu0 %v174
  %871 = vmatprep.subr.mxu0 0.0
  %872 = vmatpush1.msra.mxu0 %v173
  %873 = vmatprep.subr.mxu0 0.0
  %874 = vmatpush1.msra.mxu0 %v172
  %875 = vmatprep.subr.mxu0 0.0
  %876 = vmatpush1.msra.mxu0 %v171
  %877 = vmatprep.subr.mxu0 0.0
  %878 = vmatpush1.msra.mxu0 %v170
  %879 = vmatprep.subr.mxu0 0.0
  %880 = vmatpush1.msra.mxu0 %v169
  %881 = vmatprep.subr.mxu0 0.0
  %882 = vmatpush1.msra.mxu0 %v168
  %883 = vmatprep.subr.mxu0 0.0
  %884 = vmatpush1.msra.mxu0 %v167
  %885 = vmatprep.subr.mxu0 0.0
  %886 = vmatpush1.msra.mxu0 %v166
  %887 = vmatprep.subr.mxu0 0.0
  %888 = vmatpush2.msra.mxu0 0.0
  %889 = vmatprep.subr.mxu0 0.0
  %890 = vmatpush2.msra.mxu0 0.0
  %891 = vmatprep.subr.mxu0 0.0
  %892 = vmatpush2.msra.mxu0 0.0
  %893 = vmatprep.subr.mxu0 0.0
  %894 = vmatpush2.msra.mxu0 0.0
  %895 = vmatprep.subr.mxu0 0.0
  %896 = vmatpush2.msra.mxu0 0.0
  %897 = vmatprep.subr.mxu0 0.0
  %898 = vmatpush2.msra.mxu0 0.0
  %899 = vmatprep.subr.mxu0 0.0
  %900 = vmatpush2.msra.mxu0 0.0
  %901 = vmatprep.subr.mxu0 0.0
  %902 = vmatpush2.msra.mxu0 0.0
  %903 = vmatprep.subr.mxu0 0.0
  %904 = vmatpush2.msra.mxu0 0.0
  %905 = vmatprep.subr.mxu0 0.0
  %906 = vmatpush2.msra.mxu0 0.0
  %907 = vmatprep.subr.mxu0 0.0
  %908 = vmatpush2.msra.mxu0 0.0
  %909 = vmatprep.subr.mxu0 0.0
  %910 = vmatpush2.msra.mxu0 0.0
  %911 = vmatprep.subr.mxu0 0.0
  %912 = vmatpush2.msra.mxu0 0.0
  %913 = vmatprep.subr.mxu0 0.0
  %914 = vmatpush2.msra.mxu0 0.0
  %915 = vmatprep.subr.mxu0 0.0
  %916 = vmatpush2.msra.mxu0 0.0
  %917 = vmatprep.subr.mxu0 0.0
  %918 = vmatpush2.msra.mxu0 0.0
  %919 = vmatprep.mubr.f32.mxu0 0.0
  %920 = vmatmul.mubr.f32.gmra.mxu0 %v853
  %v921 = vpop.f32.mrf.mxu0
  %v922 = vadd.f32 0.0, %v921
  %v923 = vpop.f32.mrf.mxu0
  %924 = vdwg.mxu0
  %v926 = vrot.slane %v922, 3
  %v927 = vrot.slane %v922, 4
  %v928 = vrot.slane %v922, 5
  %v929 = vrot.slane %v922, 6
  %v930 = vrot.slane %v922, 7
  %v931 = vrot.slane %v922, 1
  %v932 = vrot.slane %v922, 2
  %v941 = vadd.f32 %v158, %v926
  %v942 = vadd.f32 %v159, %v927
  %v943 = vadd.f32 %v160, %v928
  %v944 = vadd.f32 %v161, %v929
  %v945 = vadd.f32 %v162, %v930
  %v946 = vadd.f32 %v163, %v922
  %v947 = vadd.f32 %v164, %v931
  %v948 = vadd.f32 %v165, %v932
  %v949 = vtanh.pop %v941
  %v950 = vtanh.pop %v942
  %v951 = vtanh.pop %v943
  %v952 = vtanh.pop %v944
  %v953 = vtanh.pop %v945
  %v954 = vtanh.pop %v946
  %v955 = vtanh.pop %v947
  %v956 = vtanh.pop %v948
  %957 = vst [vmem:[%s4] sm:$0x20] %v949
  %958 = vst [vmem:[%s4 + $0x8] sm:$0x20] %v950
  %959 = vst [vmem:[%s4 + $0x10] sm:$0x20] %v951
  %960 = vst [vmem:[%s4 + $0x18] sm:$0x20] %v952
  %961 = vst [vmem:[%s4 + $0x20] sm:$0x20] %v953
  %962 = vst [vmem:[%s4 + $0x28] sm:$0x20] %v954
  %963 = vst [vmem:[%s4 + $0x30] sm:$0x20] %v955
  %964 = vst [vmem:[%s4 + $0x38] sm:$0x20] %v956
  %v973 = vrot.slane %v949, 5
  %v974 = vrot.slane %v950, 4
  %v975 = vsel %vm302, %v974, %v973
  %v976 = vrot.slane %v951, 3
  %v977 = vsel %vm305, %v976, %v975
  %v978 = vrot.slane %v952, 2
  %v979 = vsel %vm308, %v978, %v977
  %v980 = vrot.slane %v953, 1
  %v981 = vsel %vm311, %v980, %v979
  %v982 = vsel %vm314, %v954, %v981
  %v983 = vrot.slane %v955, 7
  %v984 = vsel %vm317, %v983, %v982
  %v985 = vrot.slane %v956, 6
  %v986 = vsel %vm320, %v985, %v984
  %988 = vmatprep.subr.mxu0 0.0
  %989 = vmatpush1.msra.mxu0 %v181
  %990 = vmatprep.subr.mxu0 0.0
  %991 = vmatpush1.msra.mxu0 %v180
  %992 = vmatprep.subr.mxu0 0.0
  %993 = vmatpush1.msra.mxu0 %v179
  %994 = vmatprep.subr.mxu0 0.0
  %995 = vmatpush1.msra.mxu0 %v178
  %996 = vmatprep.subr.mxu0 0.0
  %997 = vmatpush1.msra.mxu0 %v177
  %998 = vmatprep.subr.mxu0 0.0
  %999 = vmatpush1.msra.mxu0 %v176
  %1000 = vmatprep.subr.mxu0 0.0
  %1001 = vmatpush1.msra.mxu0 %v175
  %1002 = vmatprep.subr.mxu0 0.0
  %1003 = vmatpush1.msra.mxu0 %v174
  %1004 = vmatprep.subr.mxu0 0.0
  %1005 = vmatpush1.msra.mxu0 %v173
  %1006 = vmatprep.subr.mxu0 0.0
  %1007 = vmatpush1.msra.mxu0 %v172
  %1008 = vmatprep.subr.mxu0 0.0
  %1009 = vmatpush1.msra.mxu0 %v171
  %1010 = vmatprep.subr.mxu0 0.0
  %1011 = vmatpush1.msra.mxu0 %v170
  %1012 = vmatprep.subr.mxu0 0.0
  %1013 = vmatpush1.msra.mxu0 %v169
  %1014 = vmatprep.subr.mxu0 0.0
  %1015 = vmatpush1.msra.mxu0 %v168
  %1016 = vmatprep.subr.mxu0 0.0
  %1017 = vmatpush1.msra.mxu0 %v167
  %1018 = vmatprep.subr.mxu0 0.0
  %1019 = vmatpush1.msra.mxu0 %v166
  %1020 = vmatprep.subr.mxu0 0.0
  %1021 = vmatpush2.msra.mxu0 0.0
  %1022 = vmatprep.subr.mxu0 0.0
  %1023 = vmatpush2.msra.mxu0 0.0
  %1024 = vmatprep.subr.mxu0 0.0
  %1025 = vmatpush2.msra.mxu0 0.0
  %1026 = vmatprep.subr.mxu0 0.0
  %1027 = vmatpush2.msra.mxu0 0.0
  %1028 = vmatprep.subr.mxu0 0.0
  %1029 = vmatpush2.msra.mxu0 0.0
  %1030 = vmatprep.subr.mxu0 0.0
  %1031 = vmatpush2.msra.mxu0 0.0
  %1032 = vmatprep.subr.mxu0 0.0
  %1033 = vmatpush2.msra.mxu0 0.0
  %1034 = vmatprep.subr.mxu0 0.0
  %1035 = vmatpush2.msra.mxu0 0.0
  %1036 = vmatprep.subr.mxu0 0.0
  %1037 = vmatpush2.msra.mxu0 0.0
  %1038 = vmatprep.subr.mxu0 0.0
  %1039 = vmatpush2.msra.mxu0 0.0
  %1040 = vmatprep.subr.mxu0 0.0
  %1041 = vmatpush2.msra.mxu0 0.0
  %1042 = vmatprep.subr.mxu0 0.0
  %1043 = vmatpush2.msra.mxu0 0.0
  %1044 = vmatprep.subr.mxu0 0.0
  %1045 = vmatpush2.msra.mxu0 0.0
  %1046 = vmatprep.subr.mxu0 0.0
  %1047 = vmatpush2.msra.mxu0 0.0
  %1048 = vmatprep.subr.mxu0 0.0
  %1049 = vmatpush2.msra.mxu0 0.0
  %1050 = vmatprep.subr.mxu0 0.0
  %1051 = vmatpush2.msra.mxu0 0.0
  %1052 = vmatprep.mubr.f32.mxu0 0.0
  %1053 = vmatmul.mubr.f32.gmra.mxu0 %v986
  %v1054 = vpop.f32.mrf.mxu0
  %v1055 = vadd.f32 0.0, %v1054
  %v1056 = vpop.f32.mrf.mxu0
  %1057 = vdwg.mxu0
  %v1059 = vrot.slane %v1055, 2
  %v1060 = vrot.slane %v1055, 3
  %v1061 = vrot.slane %v1055, 4
  %v1062 = vrot.slane %v1055, 5
  %v1063 = vrot.slane %v1055, 6
  %v1064 = vrot.slane %v1055, 7
  %v1065 = vrot.slane %v1055, 1
  %v1074 = vadd.f32 %v158, %v1059
  %v1075 = vadd.f32 %v159, %v1060
  %v1076 = vadd.f32 %v160, %v1061
  %v1077 = vadd.f32 %v161, %v1062
  %v1078 = vadd.f32 %v162, %v1063
  %v1079 = vadd.f32 %v163, %v1064
  %v1080 = vadd.f32 %v164, %v1055
  %v1081 = vadd.f32 %v165, %v1065
  %v1082 = vtanh.pop %v1074
  %v1083 = vtanh.pop %v1075
  %v1084 = vtanh.pop %v1076
  %v1085 = vtanh.pop %v1077
  %v1086 = vtanh.pop %v1078
  %v1087 = vtanh.pop %v1079
  %v1088 = vtanh.pop %v1080
  %v1089 = vtanh.pop %v1081
  %1090 = vst [vmem:[%s4] sm:$0x40] %v1082
  %1091 = vst [vmem:[%s4 + $0x8] sm:$0x40] %v1083
  %1092 = vst [vmem:[%s4 + $0x10] sm:$0x40] %v1084
  %1093 = vst [vmem:[%s4 + $0x18] sm:$0x40] %v1085
  %1094 = vst [vmem:[%s4 + $0x20] sm:$0x40] %v1086
  %1095 = vst [vmem:[%s4 + $0x28] sm:$0x40] %v1087
  %1096 = vst [vmem:[%s4 + $0x30] sm:$0x40] %v1088
  %1097 = vst [vmem:[%s4 + $0x38] sm:$0x40] %v1089
  %v1106 = vrot.slane %v1082, 6
  %v1107 = vrot.slane %v1083, 5
  %v1108 = vsel %vm302, %v1107, %v1106
  %v1109 = vrot.slane %v1084, 4
  %v1110 = vsel %vm305, %v1109, %v1108
  %v1111 = vrot.slane %v1085, 3
  %v1112 = vsel %vm308, %v1111, %v1110
  %v1113 = vrot.slane %v1086, 2
  %v1114 = vsel %vm311, %v1113, %v1112
  %v1115 = vrot.slane %v1087, 1
  %v1116 = vsel %vm314, %v1115, %v1114
  %v1117 = vsel %vm317, %v1088, %v1116
  %v1118 = vrot.slane %v1089, 7
  %v1119 = vsel %vm320, %v1118, %v1117
  %1121 = vmatprep.subr.mxu0 0.0
  %1122 = vmatpush1.msra.mxu0 %v181
  %1123 = vmatprep.subr.mxu0 0.0
  %1124 = vmatpush1.msra.mxu0 %v180
  %1125 = vmatprep.subr.mxu0 0.0
  %1126 = vmatpush1.msra.mxu0 %v179
  %1127 = vmatprep.subr.mxu0 0.0
  %1128 = vmatpush1.msra.mxu0 %v178
  %1129 = vmatprep.subr.mxu0 0.0
  %1130 = vmatpush1.msra.mxu0 %v177
  %1131 = vmatprep.subr.mxu0 0.0
  %1132 = vmatpush1.msra.mxu0 %v176
  %1133 = vmatprep.subr.mxu0 0.0
  %1134 = vmatpush1.msra.mxu0 %v175
  %1135 = vmatprep.subr.mxu0 0.0
  %1136 = vmatpush1.msra.mxu0 %v174
  %1137 = vmatprep.subr.mxu0 0.0
  %1138 = vmatpush1.msra.mxu0 %v173
  %1139 = vmatprep.subr.mxu0 0.0
  %1140 = vmatpush1.msra.mxu0 %v172
  %1141 = vmatprep.subr.mxu0 0.0
  %1142 = vmatpush1.msra.mxu0 %v171
  %1143 = vmatprep.subr.mxu0 0.0
  %1144 = vmatpush1.msra.mxu0 %v170
  %1145 = vmatprep.subr.mxu0 0.0
  %1146 = vmatpush1.msra.mxu0 %v169
  %1147 = vmatprep.subr.mxu0 0.0
  %1148 = vmatpush1.msra.mxu0 %v168
  %1149 = vmatprep.subr.mxu0 0.0
  %1150 = vmatpush1.msra.mxu0 %v167
  %1151 = vmatprep.subr.mxu0 0.0
  %1152 = vmatpush1.msra.mxu0 %v166
  %1153 = vmatprep.subr.mxu0 0.0
  %1154 = vmatpush2.msra.mxu0 0.0
  %1155 = vmatprep.subr.mxu0 0.0
  %1156 = vmatpush2.msra.mxu0 0.0
  %1157 = vmatprep.subr.mxu0 0.0
  %1158 = vmatpush2.msra.mxu0 0.0
  %1159 = vmatprep.subr.mxu0 0.0
  %1160 = vmatpush2.msra.mxu0 0.0
  %1161 = vmatprep.subr.mxu0 0.0
  %1162 = vmatpush2.msra.mxu0 0.0
  %1163 = vmatprep.subr.mxu0 0.0
  %1164 = vmatpush2.msra.mxu0 0.0
  %1165 = vmatprep.subr.mxu0 0.0
  %1166 = vmatpush2.msra.mxu0 0.0
  %1167 = vmatprep.subr.mxu0 0.0
  %1168 = vmatpush2.msra.mxu0 0.0
  %1169 = vmatprep.subr.mxu0 0.0
  %1170 = vmatpush2.msra.mxu0 0.0
  %1171 = vmatprep.subr.mxu0 0.0
  %1172 = vmatpush2.msra.mxu0 0.0
  %1173 = vmatprep.subr.mxu0 0.0
  %1174 = vmatpush2.msra.mxu0 0.0
  %1175 = vmatprep.subr.mxu0 0.0
  %1176 = vmatpush2.msra.mxu0 0.0
  %1177 = vmatprep.subr.mxu0 0.0
  %1178 = vmatpush2.msra.mxu0 0.0
  %1179 = vmatprep.subr.mxu0 0.0
  %1180 = vmatpush2.msra.mxu0 0.0
  %1181 = vmatprep.subr.mxu0 0.0
  %1182 = vmatpush2.msra.mxu0 0.0
  %1183 = vmatprep.subr.mxu0 0.0
  %1184 = vmatpush2.msra.mxu0 0.0
  %1185 = vmatprep.mubr.f32.mxu0 0.0
  %1186 = vmatmul.mubr.f32.gmra.mxu0 %v1119
  %v1187 = vpop.f32.mrf.mxu0
  %v1188 = vadd.f32 0.0, %v1187
  %v1189 = vpop.f32.mrf.mxu0
  %1190 = vdwg.mxu0
  %v1192 = vrot.slane %v1188, 1
  %v1193 = vrot.slane %v1188, 2
  %v1194 = vrot.slane %v1188, 3
  %v1195 = vrot.slane %v1188, 4
  %v1196 = vrot.slane %v1188, 5
  %v1197 = vrot.slane %v1188, 6
  %v1198 = vrot.slane %v1188, 7
  %v1207 = vadd.f32 %v158, %v1192
  %v1208 = vadd.f32 %v159, %v1193
  %v1209 = vadd.f32 %v160, %v1194
  %v1210 = vadd.f32 %v161, %v1195
  %v1211 = vadd.f32 %v162, %v1196
  %v1212 = vadd.f32 %v163, %v1197
  %v1213 = vadd.f32 %v164, %v1198
  %v1214 = vadd.f32 %v165, %v1188
  %v1215 = vtanh.pop %v1207
  %v1216 = vtanh.pop %v1208
  %v1217 = vtanh.pop %v1209
  %v1218 = vtanh.pop %v1210
  %v1219 = vtanh.pop %v1211
  %v1220 = vtanh.pop %v1212
  %v1221 = vtanh.pop %v1213
  %v1222 = vtanh.pop %v1214
  %1223 = vst [vmem:[%s4] sm:$0x80] %v1215
  %1224 = vst [vmem:[%s4 + $0x8] sm:$0x80] %v1216
  %1225 = vst [vmem:[%s4 + $0x10] sm:$0x80] %v1217
  %1226 = vst [vmem:[%s4 + $0x18] sm:$0x80] %v1218
  %1227 = vst [vmem:[%s4 + $0x20] sm:$0x80] %v1219
  %1228 = vst [vmem:[%s4 + $0x28] sm:$0x80] %v1220
  %1229 = vst [vmem:[%s4 + $0x30] sm:$0x80] %v1221
  %1230 = vst [vmem:[%s4 + $0x38] sm:$0x80] %v1222
  %v1239 = vrot.slane %v1216, 7
  %v1240 = vrot.slane %v1217, 6
  %v1241 = vsel %vm302, %v1240, %v1239
  %v1242 = vrot.slane %v1218, 5
  %v1243 = vsel %vm305, %v1242, %v1241
  %v1244 = vrot.slane %v1219, 4
  %v1245 = vsel %vm308, %v1244, %v1243
  %v1246 = vrot.slane %v1220, 3
  %v1247 = vsel %vm311, %v1246, %v1245
  %v1248 = vrot.slane %v1221, 2
  %v1249 = vsel %vm314, %v1248, %v1247
  %v1250 = vrot.slane %v1222, 1
  %v1251 = vsel %vm317, %v1250, %v1249
  %1254 = vst [vmem:[#allocation2 - $0x7] sm:$0x80] %v1215
  %1255 = vst [vmem:[#allocation2 + $0x1] sm:$0x7f] %v1251
  // Predicated region
  $region22: #{encoder_rnn_forward.1} parent=0 // pred_check
    _
  $region23: #{encoder_rnn_forward.1} parent=0 // pred_check_branch
    %1257 = sbr.rel (0) target = $region25
  $region24: #{encoder_rnn_forward.1} parent=0 // pred_region
    _
  $region25: #{encoder_rnn_forward.1} parent=0 // pred_fallthru
    _
  // Predicated region
  $region26: #{encoder_rnn_forward.1} parent=0 // pred_check
    _
  $region27: #{encoder_rnn_forward.1} parent=0 // pred_check_branch
    %1259 = sbr.rel (0) target = $region29
  $region28: #{encoder_rnn_forward.1} parent=0 // pred_region
    _
  $region29: #{encoder_rnn_forward.1} parent=0 // pred_fallthru
    _

</llo_original>
